<compile_context>
chip_gen: v5e
topology: v5e:2x2
jax: 0.10.0
libtpu: 0.0.40
codegen_flags: <defaults>
</compile_context>

<pallas_src>
import functools
import math

import jax
import jax.numpy as jnp
import numpy as np
from jax.experimental import pallas as pl
from jax.experimental.pallas import tpu as pltpu


def _round_up(n, m):
    return ((n + m - 1) // m) * m


def _ensemble_mlp_kernel(x_ref, w1_ref, b1_ref, w2_ref, b2_ref, w3_ref,
                         b3_ref, o_ref, *, chunk):
    """Fused 3-layer MLP; batch rides the 128-wide lane axis internally.

    x_ref  : (TB, F)  f32   input tile in natural (batch, feature) layout
    w1_ref : (H,  F)  f32   layer-1 weight, PyTorch (out, in) layout (VMEM-resident)
    b1_ref : (H,  1)  f32
    w2_ref : (H2, H)  f32
    b2_ref : (H2, 1)  f32
    w3_ref : (H2, 1)  f32   layer-3 weight as a column (out_features == 1)
    b3_ref : (1,)     f32   scalar bias in SMEM
    o_ref  : (1,  TB) f32   lane-dense output tile
    """
    tb = x_ref.shape[0]
    n_chunks = tb // chunk

    # Weights/biases are tiny and VMEM-resident; load once, hoisted out of the loop.
    w1 = w1_ref[...]
    b1 = b1_ref[...]
    w2 = w2_ref[...]
    b2 = b2_ref[...]
    w3 = w3_ref[...]
    b3 = b3_ref[0]

    def body(c, carry):
        start = pl.multiple_of(c * chunk, chunk)
        xc = x_ref[pl.ds(start, chunk), :]                       # (chunk, F)
        # Layer 1: contract the tiny (K = F) feature dim of both operands so the
        # batch lands on the lane axis of the result: (H, chunk).
        h1 = jax.lax.dot_general(w1, xc, (((1,), (1,)), ((), ())),
                                 preferred_element_type=jnp.float32)
        h1 = jnp.maximum(h1 + b1, 0.0)                           # bias + ReLU (VPU, f32)
        # Dropout(0.2): identity in eval / inference mode.
        # TODO(synk): training-mode dropout would need pltpu.prng_seed +
        # pltpu.prng_random_bits mask/scale; out of scope for inference.
        # Layer 2: (H2, H) @ (H, chunk) on the MXU, f32 accumulation.
        h2 = jnp.dot(w2, h1, preferred_element_type=jnp.float32)
        h2 = jnp.maximum(h2 + b2, 0.0)
        # Layer 3 (out_features == 1): VPU broadcast-multiply + sublane (XLU)
        # reduction, exact f32; avoids an M=1 MXU matmul and stays lane-dense.
        out = jnp.sum(h2 * w3, axis=0, keepdims=True) + b3       # (1, chunk)
        o_ref[:, pl.ds(start, chunk)] = out.astype(o_ref.dtype)
        return carry

    jax.lax.fori_loop(0, n_chunks, body, None, unroll=True)


@functools.partial(jax.jit, static_argnames=("tile_b", "chunk_b"))
def ensemble_nn_forward(x, params, tile_b=8192, chunk_b=512):
    """x: (B, n_models) f32 -> (B, 1) f32 (eval-mode forward of EnsembleNN).

    params = (w1, b1, w2, b2, w3, b3) in PyTorch Linear layout:
      w1 (H, F), b1 (H,), w2 (H2, H), b2 (H2,), w3 (1, H2), b3 (1,).
    """
    x = x.astype(jnp.float32)
    w1, b1, w2, b2, w3, b3 = (p.astype(jnp.float32) for p in params)
    B, F = x.shape
    H = w1.shape[0]
    H2 = w2.shape[0]

    # ---- batch tile (lane) selection --------------------------------------
    # Big tiles amortize the ~0.35 us fixed per-grid-step cost; multiple of 128;
    # don't over-pad tiny batches.
    tb = min(_round_up(max(tile_b, 128), 128), _round_up(B, 128))
    # v7x has two TensorCores: keep the "parallel" grid at >= 2 steps when the
    # batch allows it (negligible effect on single-TC v5e/v6e).
    if B > 128:
        tb = min(tb, max(128, _round_up(-(-B // 2), 128)))
    B_pad = _round_up(B, tb)
    grid = (B_pad // tb,)

    # Inner sub-chunk of the lane axis: bounds vreg pressure independently of the
    # DMA tile size. Multiple of 128 and a divisor of tb.
    cb = min(_round_up(max(chunk_b, 128), 128), tb)
    cb = math.gcd(tb, cb)

    # Only the tail of at most one tile is padded (no transpose / cast pass).
    x_in = x if B_pad == B else jnp.pad(x, ((0, B_pad - B), (0, 0)))

    b1c = b1.reshape(H, 1)
    b2c = b2.reshape(H2, 1)
    w3c = w3.reshape(H2, 1)        # column => lane-broadcast against (H2, chunk)
    b3s = b3.reshape(1)            # scalar -> SMEM

    flops = 2 * B_pad * (F * H + H * H2 + H2)
    bytes_accessed = (x_in.size * 4
                      + (w1.size + w2.size + H + H2 + H2 + 1) * 4
                      + B_pad * 4)

    kernel = functools.partial(_ensemble_mlp_kernel, chunk=cb)
    out = pl.pallas_call(
        kernel,
        out_shape=jax.ShapeDtypeStruct((1, B_pad), jnp.float32),
        grid_spec=pltpu.PrefetchScalarGridSpec(
            num_scalar_prefetch=0,
            grid=grid,
            in_specs=[
                pl.BlockSpec((tb, F), lambda i: (i, 0)),             # x tile (natural layout)
                pl.BlockSpec(memory_space=pltpu.MemorySpace.VMEM),   # W1 (resident, single copy)
                pl.BlockSpec(memory_space=pltpu.MemorySpace.VMEM),   # b1
                pl.BlockSpec(memory_space=pltpu.MemorySpace.VMEM),   # W2
                pl.BlockSpec(memory_space=pltpu.MemorySpace.VMEM),   # b2
                pl.BlockSpec(memory_space=pltpu.MemorySpace.VMEM),   # W3 column
                pl.BlockSpec(memory_space=pltpu.MemorySpace.SMEM),   # b3 scalar
            ],
            out_specs=pl.BlockSpec((1, tb), lambda i: (0, i)),       # lane-dense output
        ),
        compiler_params=pltpu.CompilerParams(
            dimension_semantics=("parallel",),
            vmem_limit_bytes=32 * 1024 * 1024),
        cost_estimate=pl.CostEstimate(flops=flops, transcendentals=0,
                                      bytes_accessed=bytes_accessed),
    )(x_in, w1, b1c, w2, b2c, w3c, b3s)

    return out[0, :B].reshape(B, 1)


def init_params(key, n_models, hidden_size=64):
    """PyTorch Linear default init: U(-1/sqrt(fan_in), +1/sqrt(fan_in)).

    Weights are stored in PyTorch layout (out_features, in_features).
    """
    dims = [(hidden_size, n_models),
            (hidden_size // 2, hidden_size),
            (1, hidden_size // 2)]
    params = []
    for (fan_out, fan_in) in dims:
        key, kw, kb = jax.random.split(key, 3)
        bound = 1.0 / float(fan_in) ** 0.5
        w = jax.random.uniform(kw, (fan_out, fan_in), jnp.float32, -bound, bound)
        b = jax.random.uniform(kb, (fan_out,), jnp.float32, -bound, bound)
        params += [w, b]
    return tuple(params)


def _ref_forward_np(x, params):
    """Full-precision numpy reference of the PyTorch eval-mode forward."""
    w1, b1, w2, b2, w3, b3 = (np.asarray(p, dtype=np.float64) for p in params)
    xh = np.asarray(x, dtype=np.float64)
    h = np.maximum(xh @ w1.T + b1, 0.0)
    h = np.maximum(h @ w2.T + b2, 0.0)
    return h @ w3.T + b3


if __name__ == "__main__":
    key = jax.random.PRNGKey(0)
    n_models = 4
    hidden_size = 32
    batch = 8

    k_x, k_p, k_x2, k_p2 = jax.random.split(key, 4)
    x = jax.random.normal(k_x, (batch, n_models), jnp.float32)
    params = init_params(k_p, n_models, hidden_size)

    out = jax.block_until_ready(ensemble_nn_forward(x, params))
    assert out.shape == (batch, 1)
    ref = _ref_forward_np(x, params)
    assert np.allclose(np.asarray(out), ref, atol=5e-2, rtol=5e-2), \
        "small-batch output mismatch"

    # Second check: module-default hidden size, a batch that needs tail padding,
    # >= 2 grid steps and > 1 inner sub-chunk per tile.
    batch2 = 1000
    x2 = jax.random.normal(k_x2, (batch2, n_models), jnp.float32)
    params2 = init_params(k_p2, n_models, 64)
    out2 = jax.block_until_ready(
        ensemble_nn_forward(x2, params2, tile_b=1024, chunk_b=256))
    assert out2.shape == (batch2, 1)
    ref2 = _ref_forward_np(x2, params2)
    assert np.allclose(np.asarray(out2), ref2, atol=5e-2, rtol=5e-2), \
        "padded multi-step output mismatch"

    print("KERNEL_OK")
</pallas_src>

<mosaic_0001>
module attributes {stable_mosaic.version = 11 : i64} {
  func.func @_ensemble_mlp_kernel(%arg0: i32, %arg1: memref<128x4xf32, #tpu.memory_space<vmem>>, %arg2: memref<32x4xf32, #tpu.memory_space<vmem>>, %arg3: memref<32x1xf32, #tpu.memory_space<vmem>>, %arg4: memref<16x32xf32, #tpu.memory_space<vmem>>, %arg5: memref<16x1xf32, #tpu.memory_space<vmem>>, %arg6: memref<16x1xf32, #tpu.memory_space<vmem>>, %arg7: memref<1xf32, #tpu.memory_space<smem>>, %arg8: memref<1x128xf32, #tpu.memory_space<vmem>>) attributes {dimension_semantics = [#tpu.dimension_semantics<parallel>], iteration_bounds = array<i64: 1>, scalar_prefetch = 0 : i64, scratch_operands = 0 : i64, tpu.core_type = #tpu.core_type<tc>, window_params = [{transform_indices = @transform_0, window_bounds = array<i64: 128, 4>}, {pipeline_mode = #tpu.pipeline_mode<synchronous>, transform_indices = @transform_1, window_bounds = array<i64: 32, 4>}, {pipeline_mode = #tpu.pipeline_mode<synchronous>, transform_indices = @transform_2, window_bounds = array<i64: 32, 1>}, {pipeline_mode = #tpu.pipeline_mode<synchronous>, transform_indices = @transform_3, window_bounds = array<i64: 16, 32>}, {pipeline_mode = #tpu.pipeline_mode<synchronous>, transform_indices = @transform_4, window_bounds = array<i64: 16, 1>}, {pipeline_mode = #tpu.pipeline_mode<synchronous>, transform_indices = @transform_5, window_bounds = array<i64: 16, 1>}, {transform_indices = @transform_6, window_bounds = array<i64: 1>}, {transform_indices = @transform_7, window_bounds = array<i64: 1, 128>}]} {
    %c0 = arith.constant 0 : index
    %c0_0 = arith.constant 0 : index
    %0 = vector.load %arg2[%c0, %c0_0] : memref<32x4xf32, #tpu.memory_space<vmem>>, vector<32x4xf32>
    %c0_1 = arith.constant 0 : index
    %c0_2 = arith.constant 0 : index
    %1 = vector.load %arg3[%c0_1, %c0_2] : memref<32x1xf32, #tpu.memory_space<vmem>>, vector<32x1xf32>
    %c0_3 = arith.constant 0 : index
    %c0_4 = arith.constant 0 : index
    %2 = vector.load %arg4[%c0_3, %c0_4] : memref<16x32xf32, #tpu.memory_space<vmem>>, vector<16x32xf32>
    %c0_5 = arith.constant 0 : index
    %c0_6 = arith.constant 0 : index
    %3 = vector.load %arg5[%c0_5, %c0_6] : memref<16x1xf32, #tpu.memory_space<vmem>>, vector<16x1xf32>
    %c0_7 = arith.constant 0 : index
    %c0_8 = arith.constant 0 : index
    %4 = vector.load %arg6[%c0_7, %c0_8] : memref<16x1xf32, #tpu.memory_space<vmem>>, vector<16x1xf32>
    %c0_9 = arith.constant 0 : index
    %5 = memref.load %arg7[%c0_9] : memref<1xf32, #tpu.memory_space<smem>>
    %c0_i32 = arith.constant 0 : i32
    %c128_i32 = arith.constant 128 : i32
    %6 = arith.muli %c0_i32, %c128_i32 : i32
    %7 = tpu.assume_multiple %6, 128 : i32
    %8 = arith.index_cast %7 : i32 to index
    %c0_10 = arith.constant 0 : index
    %9 = vector.load %arg1[%8, %c0_10] : memref<128x4xf32, #tpu.memory_space<vmem>>, vector<128x4xf32>
    %cst = arith.constant dense<0.000000e+00> : vector<32x128xf32>
    %10 = tpu.matmul %0, %9, %cst {dimension_numbers = #tpu.dot_dimension_numbers<[1], [1], [0], [0], [0, 0, 1, 0], [], []>} : vector<32x4xf32>, vector<128x4xf32>, vector<32x128xf32> -> vector<32x128xf32>
    %11 = vector.broadcast %1 : vector<32x1xf32> to vector<32x128xf32>
    %12 = arith.addf %10, %11 : vector<32x128xf32>
    %cst_11 = arith.constant 0.000000e+00 : f32
    %13 = vector.broadcast %cst_11 : f32 to vector<32x128xf32>
    %14 = arith.maximumf %12, %13 : vector<32x128xf32>
    %cst_12 = arith.constant dense<0.000000e+00> : vector<16x128xf32>
    %15 = tpu.matmul %2, %14, %cst_12 {dimension_numbers = #tpu.dot_dimension_numbers<[1], [0], [0], [1], [0, 0, 1, 1], [], []>} : vector<16x32xf32>, vector<32x128xf32>, vector<16x128xf32> -> vector<16x128xf32>
    %16 = vector.broadcast %3 : vector<16x1xf32> to vector<16x128xf32>
    %17 = arith.addf %15, %16 : vector<16x128xf32>
    %cst_13 = arith.constant 0.000000e+00 : f32
    %18 = vector.broadcast %cst_13 : f32 to vector<16x128xf32>
    %19 = arith.maximumf %17, %18 : vector<16x128xf32>
    %20 = vector.broadcast %4 : vector<16x1xf32> to vector<16x128xf32>
    %21 = arith.mulf %19, %20 : vector<16x128xf32>
    %cst_14 = arith.constant dense<0.000000e+00> : vector<128xf32>
    %22 = vector.multi_reduction <add>, %21, %cst_14 [0] : vector<16x128xf32> to vector<128xf32>
    %23 = vector.shape_cast %22 : vector<128xf32> to vector<1x128xf32>
    %24 = vector.broadcast %5 : f32 to vector<1x128xf32>
    %25 = arith.addf %23, %24 : vector<1x128xf32>
    %c0_15 = arith.constant 0 : index
    %26 = arith.index_cast %7 : i32 to index
    %27 = vector.load %arg8[%c0_15, %26] : memref<1x128xf32, #tpu.memory_space<vmem>>, vector<1x128xf32>
    tpu.vector_store %arg8[%c0_15, %26], %25 {strides = array<i32>} : memref<1x128xf32, #tpu.memory_space<vmem>>, vector<1x128xf32>,
    %c1_i32 = arith.constant 1 : i32
    return
  }
  func.func @transform_0(%arg0: i32) -> (i32, i32) {
    %c0_i32 = arith.constant 0 : i32
    %c0_i32_0 = arith.constant 0 : i32
    return %arg0, %c0_i32 : i32, i32
  }
  func.func @transform_1(%arg0: i32) -> (i32, i32) {
    %c0_i32 = arith.constant 0 : i32
    %c0_i32_0 = arith.constant 0 : i32
    %c0_i32_1 = arith.constant 0 : i32
    return %c0_i32, %c0_i32_0 : i32, i32
  }
  func.func @transform_2(%arg0: i32) -> (i32, i32) {
    %c0_i32 = arith.constant 0 : i32
    %c0_i32_0 = arith.constant 0 : i32
    %c0_i32_1 = arith.constant 0 : i32
    return %c0_i32, %c0_i32_0 : i32, i32
  }
  func.func @transform_3(%arg0: i32) -> (i32, i32) {
    %c0_i32 = arith.constant 0 : i32
    %c0_i32_0 = arith.constant 0 : i32
    %c0_i32_1 = arith.constant 0 : i32
    return %c0_i32, %c0_i32_0 : i32, i32
  }
  func.func @transform_4(%arg0: i32) -> (i32, i32) {
    %c0_i32 = arith.constant 0 : i32
    %c0_i32_0 = arith.constant 0 : i32
    %c0_i32_1 = arith.constant 0 : i32
    return %c0_i32, %c0_i32_0 : i32, i32
  }
  func.func @transform_5(%arg0: i32) -> (i32, i32) {
    %c0_i32 = arith.constant 0 : i32
    %c0_i32_0 = arith.constant 0 : i32
    %c0_i32_1 = arith.constant 0 : i32
    return %c0_i32, %c0_i32_0 : i32, i32
  }
  func.func @transform_6(%arg0: i32) -> i32 {
    %c0_i32 = arith.constant 0 : i32
    %c0_i32_0 = arith.constant 0 : i32
    return %c0_i32 : i32
  }
  func.func @transform_7(%arg0: i32) -> (i32, i32) {
    %c0_i32 = arith.constant 0 : i32
    %c0_i32_0 = arith.constant 0 : i32
    return %c0_i32, %arg0 : i32, i32
  }
}

</mosaic_0001>

<llo_original>
// kernel: ensemble_nn_forward.1
$region0: #{ensemble_nn_forward.1}
  #allocation0 [shape = 'u32[]', space=smem, size = 0x4, offset = 0x4, fixed_abs, tag = 'smem constant byte address 0x4 - core index']
  #allocation1 [shape = 'u32[72,128]{1,0:T(1,128)}', space=vmem, size = 0x9000, scoped, tag = 'internal scratch']
  #allocation2 [shape = 'f32[1]{0:T(128)S(6)}', space=smem, size = 0x200, scoped, tag = 'scoped memory for ensemble_nn_forward.1']
  %s0 = inlined_call_operand.vmem [shape: f32[128,4], index: 0, kind: input, shape index: {}]
  %s1 = inlined_call_operand.vmem [shape: f32[32,4], index: 1, kind: input, shape index: {}]
  %s2 = inlined_call_operand.vmem [shape: f32[32,1], index: 2, kind: input, shape index: {}]
  %s3 = inlined_call_operand.vmem [shape: f32[16,32], index: 3, kind: input, shape index: {}]
  %s4 = inlined_call_operand.vmem [shape: f32[16,1], index: 4, kind: input, shape index: {}]
  %s5 = inlined_call_operand.vmem [shape: f32[16,1], index: 5, kind: input, shape index: {}]
  %s6 = inlined_call_operand.<no memory space> [shape: f32[1], index: 6, kind: input, shape index: {}]
  %s7 = inlined_call_operand.vmem [shape: f32[1,128], index: 7, kind: output, shape index: {}]
  %s8 = sld [smem:[#allocation0]]
  $region38: #{ensemble_nn_forward.1} parent=0
    _
  %s10 = ssub.s32 1, %s8
  %s11 = scalar_select 0, %s10, %s8
  %12 = sst [smem:[#allocation2]] %s6
  // Predicated region
  $region2: #{ensemble_nn_forward.1} parent=0 // pred_check
    _
  $region3: #{ensemble_nn_forward.1} parent=0 // pred_check_branch
    %14 = sbr.rel (0) target = $region5
  $region4: #{ensemble_nn_forward.1} parent=0 // pred_region
    _
  $region5: #{ensemble_nn_forward.1} parent=0 // pred_fallthru
    _
  // Predicated region
  $region6: #{ensemble_nn_forward.1} parent=0 // pred_check
    _
  $region7: #{ensemble_nn_forward.1} parent=0 // pred_check_branch
    %16 = sbr.rel (0) target = $region9
  $region8: #{ensemble_nn_forward.1} parent=0 // pred_region
    _
  $region9: #{ensemble_nn_forward.1} parent=0 // pred_fallthru
    _
  // Predicated region
  $region10: #{ensemble_nn_forward.1} parent=0 // pred_check
    _
  $region11: #{ensemble_nn_forward.1} parent=0 // pred_check_branch
    %18 = sbr.rel (0) target = $region13
  $region12: #{ensemble_nn_forward.1} parent=0 // pred_region
    _
  $region13: #{ensemble_nn_forward.1} parent=0 // pred_fallthru
    _
  // Predicated region
  $region14: #{ensemble_nn_forward.1} parent=0 // pred_check
    _
  $region15: #{ensemble_nn_forward.1} parent=0 // pred_check_branch
    %20 = sbr.rel (0) target = $region17
  $region16: #{ensemble_nn_forward.1} parent=0 // pred_region
    _
  $region17: #{ensemble_nn_forward.1} parent=0 // pred_fallthru
    _
  // Predicated region
  $region18: #{ensemble_nn_forward.1} parent=0 // pred_check
    _
  $region19: #{ensemble_nn_forward.1} parent=0 // pred_check_branch
    %22 = sbr.rel (0) target = $region21
  $region20: #{ensemble_nn_forward.1} parent=0 // pred_region
    _
  $region21: #{ensemble_nn_forward.1} parent=0 // pred_fallthru
    _
  // Predicated region
  $region22: #{ensemble_nn_forward.1} parent=0 // pred_check
    _
  $region23: #{ensemble_nn_forward.1} parent=0 // pred_check_branch
    %24 = sbr.rel (0) target = $region25
  $region24: #{ensemble_nn_forward.1} parent=0 // pred_region
    _
  $region25: #{ensemble_nn_forward.1} parent=0 // pred_fallthru
    _
  // Predicated region
  $region26: #{ensemble_nn_forward.1} parent=0 // pred_check
    _
  $region27: #{ensemble_nn_forward.1} parent=0 // pred_check_branch
    %26 = sbr.rel (0) target = $region29
  $region28: #{ensemble_nn_forward.1} parent=0 // pred_region
    _
  $region29: #{ensemble_nn_forward.1} parent=0 // pred_fallthru
    _
  %v27 = vld [vmem:[%s1] sm:$0xff]
  %v28 = vld [vmem:[%s1 + $0x8] sm:$0xff]
  %v29 = vld [vmem:[%s1 + $0x10] sm:$0xff]
  %v30 = vld [vmem:[%s1 + $0x18] sm:$0xff]
  %v31 = vld [vmem:[%s2] sm:$0xff]
  %v32 = vld [vmem:[%s2 + $0x8] sm:$0xff]
  %v33 = vld [vmem:[%s2 + $0x10] sm:$0xff]
  %v34 = vld [vmem:[%s2 + $0x18] sm:$0xff]
  %v35 = vld [vmem:[%s3] sm:$0xff]
  %v36 = vld [vmem:[%s3 + $0x8] sm:$0xff]
  %v37 = vld [vmem:[%s4] sm:$0xff]
  %v38 = vld [vmem:[%s4 + $0x8] sm:$0xff]
  %v39 = vld [vmem:[%s5] sm:$0xff]
  %v40 = vld [vmem:[%s5 + $0x8] sm:$0xff]
  %s41 = sld [smem:[#allocation2]]
  %v42 = vld [vmem:[%s0] sm:$0xff]
  %v43 = vld [vmem:[%s0 + $0x8] sm:$0xff]
  %v44 = vld [vmem:[%s0 + $0x10] sm:$0xff]
  %v45 = vld [vmem:[%s0 + $0x18] sm:$0xff]
  %v46 = vld [vmem:[%s0 + $0x20] sm:$0xff]
  %v47 = vld [vmem:[%s0 + $0x28] sm:$0xff]
  %v48 = vld [vmem:[%s0 + $0x30] sm:$0xff]
  %v49 = vld [vmem:[%s0 + $0x38] sm:$0xff]
  %v50 = vld [vmem:[%s0 + $0x40] sm:$0xff]
  %v51 = vld [vmem:[%s0 + $0x48] sm:$0xff]
  %v52 = vld [vmem:[%s0 + $0x50] sm:$0xff]
  %v53 = vld [vmem:[%s0 + $0x58] sm:$0xff]
  %v54 = vld [vmem:[%s0 + $0x60] sm:$0xff]
  %v55 = vld [vmem:[%s0 + $0x68] sm:$0xff]
  %v56 = vld [vmem:[%s0 + $0x70] sm:$0xff]
  %v57 = vld [vmem:[%s0 + $0x78] sm:$0xff]
  %59 = vset.pattern.permute.xlu0 0
  %60 = vperm.xlu0 %59, %v31
  %v61 = vpop.permute.xlu0 %60
  %64 = vset.pattern.permute.xlu0 0
  %65 = vperm.xlu0 %64, %v32
  %v66 = vpop.permute.xlu0 %65
  %69 = vset.pattern.permute.xlu0 0
  %70 = vperm.xlu0 %69, %v33
  %v71 = vpop.permute.xlu0 %70
  %74 = vset.pattern.permute.xlu0 0
  %75 = vperm.xlu0 %74, %v34
  %v76 = vpop.permute.xlu0 %75
  %vm78 = vcmask 31744
  %v80 = vsel %vm78, %v27, 0
  %v83 = vsel %vm78, %v28, 0
  %v86 = vsel %vm78, %v29, 0
  %v89 = vsel %vm78, %v30, 0
  %v92 = vsel %vm78, %v42, 0
  %v95 = vsel %vm78, %v43, 0
  %v98 = vsel %vm78, %v44, 0
  %v101 = vsel %vm78, %v45, 0
  %v104 = vsel %vm78, %v46, 0
  %v107 = vsel %vm78, %v47, 0
  %v110 = vsel %vm78, %v48, 0
  %v113 = vsel %vm78, %v49, 0
  %v116 = vsel %vm78, %v50, 0
  %v119 = vsel %vm78, %v51, 0
  %v122 = vsel %vm78, %v52, 0
  %v125 = vsel %vm78, %v53, 0
  %v128 = vsel %vm78, %v54, 0
  %v131 = vsel %vm78, %v55, 0
  %v134 = vsel %vm78, %v56, 0
  %v137 = vsel %vm78, %v57, 0
  %139 = vmatpush.xpose.msra.mxu0 %v137
  %140 = vmatpush.xpose.msra.mxu0 %v134
  %141 = vmatpush.xpose.msra.mxu0 %v131
  %142 = vmatpush.xpose.msra.mxu0 %v128
  %143 = vmatpush.xpose.msra.mxu0 %v125
  %144 = vmatpush.xpose.msra.mxu0 %v122
  %145 = vmatpush.xpose.msra.mxu0 %v119
  %146 = vmatpush.xpose.msra.mxu0 %v116
  %147 = vmatpush.xpose.msra.mxu0 %v113
  %148 = vmatpush.xpose.msra.mxu0 %v110
  %149 = vmatpush.xpose.msra.mxu0 %v107
  %150 = vmatpush.xpose.msra.mxu0 %v104
  %151 = vmatpush.xpose.msra.mxu0 %v101
  %152 = vmatpush.xpose.msra.mxu0 %v98
  %153 = vmatpush.xpose.msra.mxu0 %v95
  %154 = vmatpush.xpose.msra.mxu0 %v92
  %155 = vmatmul.f32.gmra.mxu0 %v80
  %v156 = vpop.f32.mrf.mxu0
  %v157 = vadd.f32 %v61, %v156
  %158 = vmatmul.f32.gmra.mxu0 %v83
  %v159 = vpop.f32.mrf.mxu0
  %v160 = vadd.f32 %v66, %v159
  %161 = vmatmul.f32.gmra.mxu0 %v86
  %v162 = vpop.f32.mrf.mxu0
  %v163 = vadd.f32 %v71, %v162
  %164 = vmatmul.f32.gmra.mxu0 %v89
  %v165 = vpop.f32.mrf.mxu0
  %v166 = vadd.f32 %v76, %v165
  %167 = vdwg.mxu0
  %v168 = vmax.f32 %v157, 0.0
  %v169 = vmax.f32 %v160, 0.0
  %v170 = vmax.f32 %v163, 0.0
  %v171 = vmax.f32 %v166, 0.0
  %173 = vset.pattern.permute.xlu0 0
  %174 = vperm.xlu0 %173, %v37
  %v175 = vpop.permute.xlu0 %174
  %178 = vset.pattern.permute.xlu0 0
  %179 = vperm.xlu0 %178, %v38
  %v180 = vpop.permute.xlu0 %179
  %vm182 = vcmask 261120
  %v184 = vsel %vm182, %v35, 0
  %v187 = vsel %vm182, %v36, 0
  %189 = vmatpush.msra.mxu0 0.0
  %190 = vmatpush.msra.mxu0 0.0
  %191 = vmatpush.msra.mxu0 0.0
  %192 = vmatpush.msra.mxu0 0.0
  %193 = vmatpush.msra.mxu0 0.0
  %194 = vmatpush.msra.mxu0 0.0
  %195 = vmatpush.msra.mxu0 0.0
  %196 = vmatpush.msra.mxu0 0.0
  %197 = vmatpush.msra.mxu0 0.0
  %198 = vmatpush.msra.mxu0 0.0
  %199 = vmatpush.msra.mxu0 0.0
  %200 = vmatpush.msra.mxu0 0.0
  %201 = vmatpush.msra.mxu0 %v171
  %202 = vmatpush.msra.mxu0 %v170
  %203 = vmatpush.msra.mxu0 %v169
  %204 = vmatpush.msra.mxu0 %v168
  %205 = vmatmul.f32.gmra.mxu0 %v184
  %v206 = vpop.f32.mrf.mxu0
  %v207 = vadd.f32 %v175, %v206
  %208 = vmatmul.f32.gmra.mxu0 %v187
  %v209 = vpop.f32.mrf.mxu0
  %v210 = vadd.f32 %v180, %v209
  %211 = vdwg.mxu0
  %v212 = vmax.f32 %v207, 0.0
  %v213 = vmax.f32 %v210, 0.0
  %215 = vset.pattern.permute.xlu0 0
  %216 = vperm.xlu0 %215, %v39
  %v217 = vpop.permute.xlu0 %216
  %220 = vset.pattern.permute.xlu0 0
  %221 = vperm.xlu0 %220, %v40
  %v222 = vpop.permute.xlu0 %221
  %v224 = vmul.f32 %v212, %v217
  %v225 = vmul.f32 %v213, %v222
  %v226 = vadd.f32 %v224, %v225
  %v227 = vrot.slane %v226, 4
  %v228 = vadd.f32 %v226, %v227
  %v229 = vrot.slane %v228, 2
  %v230 = vadd.f32 %v228, %v229
  %v231 = vrot.slane %v230, 1
  %v232 = vadd.f32 %v230, %v231
  %v233 = vstv %s41
  %v234 = vadd.f32 %v232, %v233
  %235 = vst [vmem:[%s7] sm:$0x1] %v234
  // Predicated region
  $region30: #{ensemble_nn_forward.1} parent=0 // pred_check
    _
  $region31: #{ensemble_nn_forward.1} parent=0 // pred_check_branch
    %237 = sbr.rel (0) target = $region33
  $region32: #{ensemble_nn_forward.1} parent=0 // pred_region
    _
  $region33: #{ensemble_nn_forward.1} parent=0 // pred_fallthru
    _
  // Predicated region
  $region34: #{ensemble_nn_forward.1} parent=0 // pred_check
    _
  $region35: #{ensemble_nn_forward.1} parent=0 // pred_check_branch
    %239 = sbr.rel (0) target = $region37
  $region36: #{ensemble_nn_forward.1} parent=0 // pred_region
    _
  $region37: #{ensemble_nn_forward.1} parent=0 // pred_fallthru
    _

</llo_original>
